<compile_context>
chip_gen: v7x
topology: tpu7x:2x2x1
jax: 0.10.0
libtpu: 0.0.40
codegen_flags: <defaults>
</compile_context>

<pallas_src>
import functools

import jax
import jax.numpy as jnp
from jax.experimental import pallas as pl
from jax.experimental.pallas import tpu as pltpu


def _patch_merging_kernel(x_ref, w1_ref, b1_ref, wd_ref, bd_ref,
                          w3_ref, b3_ref, o_ref, *, H2, W2):
    # x_ref : (4, Bb, H2*W2, C) bf16 -- four stride-2 phases (phase-major) of Bb images
    # wd_ref: (9, Ch) f32           -- depthwise 3x3 weights, k = ky*3 + kx
    # o_ref : (Bb, H2*W2, Cout)
    Bb = x_ref.shape[1]
    C = x_ref.shape[-1]
    Ch = w1_ref.shape[1]
    Cout = w3_ref.shape[1]
    n = Bb * H2 * W2

    # (1) 1x1 conv C -> Ch, bias, ReLU.  One bf16 MXU matmul covers all four
    #     phases of every image in the batch block (large M, f32 accumulate).
    x2d = x_ref[...].reshape(4 * n, C)
    h1 = jnp.dot(x2d, w1_ref[...], preferred_element_type=jnp.float32)
    h1 = jnp.maximum(h1 + b1_ref[...], 0.0)                     # (4n, Ch) f32

    # (2) depthwise 3x3, stride 2, pad 1 on the four phase planes (f32, VPU).
    ph = h1.reshape(4 * Bb, H2, W2, Ch)          # leading index = phase*Bb + image
    p00 = ph[0 * Bb:1 * Bb]                      # h1 at (2*y2,   2*x2)
    p01 = ph[1 * Bb:2 * Bb]                      # h1 at (2*y2,   2*x2+1)
    p10 = ph[2 * Bb:3 * Bb]                      # h1 at (2*y2+1, 2*x2)
    p11 = ph[3 * Bb:4 * Bb]                      # h1 at (2*y2+1, 2*x2+1)

    zrow = jnp.zeros((Bb, 1, W2, Ch), jnp.float32)
    zcol = jnp.zeros((Bb, H2, 1, Ch), jnp.float32)

    def up(t):    # output row y2 reads phase row y2-1 (zero at the top border)
        return jnp.concatenate([zrow, t[:, :H2 - 1]], axis=1)

    def left(t):  # output col x2 reads phase col x2-1 (zero at the left border)
        return jnp.concatenate([zcol, t[:, :, :W2 - 1]], axis=2)

    w = wd_ref[...]                              # (9, Ch), read once; k = ky*3 + kx
    acc = p00 * w[4]                             # centre tap initialises acc
    acc = acc + p10 * w[7]
    acc = acc + up(p10) * w[1]
    acc = acc + p01 * w[5]
    acc = acc + left(p01) * w[3]
    acc = acc + p11 * w[8]
    acc = acc + up(p11) * w[2]
    p11l = left(p11)
    acc = acc + p11l * w[6]
    acc = acc + up(p11l) * w[0]
    h2 = jnp.maximum(acc + bd_ref[...], 0.0)     # (Bb, H2, W2, Ch) f32

    # (3) 1x1 conv Ch -> Cout (BatchNorm folded into w3/b3), bf16 MXU matmul.
    h2b = h2.reshape(n, Ch).astype(w3_ref.dtype)
    out = jnp.dot(h2b, w3_ref[...], preferred_element_type=jnp.float32)
    out = out + b3_ref[...]
    o_ref[...] = out.reshape(Bb, H2 * W2, Cout).astype(o_ref.dtype)


def _pick_batch_block(B, H2, W2, Ch, Cout, budget_bytes):
    """Largest divisor of B whose per-step intermediates fit the VMEM budget."""
    plane = H2 * W2 * Ch * 4                      # one f32 phase/acc plane
    per_img = (2 * 4 * H2 * W2 * 128 * 2          # lane-padded bf16 input, 2x buffered
               + 4 * plane                        # h1 (four phase planes live)
               + 3 * plane                        # acc + shifted temporaries
               + H2 * W2 * Ch * 2                 # h2 cast to bf16
               + 2 * H2 * W2 * max(Cout, 128) * 4)  # output block, 2x buffered
    cap = max(1, budget_bytes // per_img)
    bb = 1
    for d in range(1, B + 1):
        if B % d == 0 and d <= cap:
            bb = d
    return bb


def patch_merging_forward(x, x_size, params, eps=1e-5,
                          vmem_budget_bytes=12 * 1024 * 1024):
    """x: (B, L, C) with L == H*W.  Returns (B, (H//2)*(W//2), 2*C)."""
    H, W = x_size
    B, L, C = x.shape
    assert L == H * W, "input feature has wrong size"
    assert H % 2 == 0 and W % 2 == 0, "stride-2 merge needs even H, W"
    H2, W2 = H // 2, W // 2
    # TODO(synk): pad W wrapper-side to support W2 % 8 != 0 (keeps in-kernel
    #             reshapes layout-trivial / 8-sublane aligned).
    assert W2 % 8 == 0, "W//2 must be a multiple of 8 for this kernel"

    w1, b1, wd, bd, w3, b3, gamma, beta, mean, var = params
    Ch = w1.shape[1]
    Cout = w3.shape[1]

    # Fold inference-mode BatchNorm into the final 1x1 conv (wrapper side).
    s = gamma * jax.lax.rsqrt(var + eps)
    w3f = (w3 * s[None, :]).astype(jnp.bfloat16)
    b3f = ((b3 - mean) * s + beta).reshape(1, Cout)

    # Wrapper-side layout plumbing: split x into the four stride-2 phases
    # (phase-major so the kernel slices contiguous planes) and cast to bf16.
    x_ph = (x.reshape(B, H2, 2, W2, 2, C)
             .transpose(2, 4, 0, 1, 3, 5)         # (dy, dx, B, H2, W2, C)
             .reshape(4, B, H2 * W2, C)
             .astype(jnp.bfloat16))

    w1b = w1.astype(jnp.bfloat16)
    b1r = b1.reshape(1, Ch)
    wd9 = wd.reshape(9, Ch)
    bdr = bd.reshape(1, Ch)

    Bb = _pick_batch_block(B, H2, W2, Ch, Cout, vmem_budget_bytes)
    num_blocks = B // Bb

    kernel = functools.partial(_patch_merging_kernel, H2=H2, W2=W2)

    return pl.pallas_call(
        kernel,
        out_shape=jax.ShapeDtypeStruct((B, H2 * W2, Cout), x.dtype),
        grid=(num_blocks,),
        in_specs=[
            pl.BlockSpec((4, Bb, H2 * W2, C), lambda b: (0, b, 0, 0)),
            pl.BlockSpec((C, Ch), lambda b: (0, 0)),
            pl.BlockSpec((1, Ch), lambda b: (0, 0)),
            pl.BlockSpec((9, Ch), lambda b: (0, 0)),
            pl.BlockSpec((1, Ch), lambda b: (0, 0)),
            pl.BlockSpec((Ch, Cout), lambda b: (0, 0)),
            pl.BlockSpec((1, Cout), lambda b: (0, 0)),
        ],
        out_specs=pl.BlockSpec((Bb, H2 * W2, Cout), lambda b: (b, 0, 0)),
        compiler_params=pltpu.CompilerParams(
            dimension_semantics=("parallel",),
            vmem_limit_bytes=32 * 1024 * 1024),
    )(x_ph, w1b, b1r, wd9, bdr, w3f, b3f)


def patch_merging_reference(x, x_size, params, eps=1e-5):
    """Pure-JAX f32 reference (independent formulation, for correctness check)."""
    H, W = x_size
    B, L, C = x.shape
    w1, b1, wd, bd, w3, b3, gamma, beta, mean, var = params
    Ch = w1.shape[1]

    xi = x.reshape(B, H, W, C)
    h1 = jax.nn.relu(jnp.einsum('bhwc,cd->bhwd', xi, w1) + b1)

    dn = jax.lax.conv_dimension_numbers(h1.shape, (3, 3, 1, Ch),
                                        ('NHWC', 'HWIO', 'NHWC'))
    h2 = jax.lax.conv_general_dilated(
        h1, wd.reshape(3, 3, 1, Ch), window_strides=(2, 2),
        padding=((1, 1), (1, 1)), dimension_numbers=dn,
        feature_group_count=Ch)
    h2 = jax.nn.relu(h2 + bd)

    y = jnp.einsum('bhwc,cd->bhwd', h2, w3) + b3
    y = gamma * (y - mean) * jax.lax.rsqrt(var + eps) + beta
    _, H2, W2, Cout = y.shape
    return y.reshape(B, H2 * W2, Cout)


def init_params(key, dim, ratio=4.0):
    C = dim
    Ch = int(2 * C * ratio)          # hidden channels of the inverted bottleneck
    Cout = 2 * C
    ks = jax.random.split(key, 10)
    s = 0.1
    w1 = s * jax.random.normal(ks[0], (C, Ch), jnp.float32)
    b1 = s * jax.random.normal(ks[1], (Ch,), jnp.float32)
    wd = s * jax.random.normal(ks[2], (3, 3, Ch), jnp.float32)   # depthwise HWC
    bd = s * jax.random.normal(ks[3], (Ch,), jnp.float32)
    w3 = s * jax.random.normal(ks[4], (Ch, Cout), jnp.float32)
    b3 = s * jax.random.normal(ks[5], (Cout,), jnp.float32)
    gamma = 1.0 + s * jax.random.normal(ks[6], (Cout,), jnp.float32)
    beta = s * jax.random.normal(ks[7], (Cout,), jnp.float32)
    mean = s * jax.random.normal(ks[8], (Cout,), jnp.float32)
    var = jax.random.uniform(ks[9], (Cout,), jnp.float32, 0.5, 1.5)
    return (w1, b1, wd, bd, w3, b3, gamma, beta, mean, var)


if __name__ == "__main__":
    B, H, W = 2, 16, 16
    dim = 16                          # hidden = 8*dim = 128 (lane-dense), out = 2*dim = 32
    key = jax.random.PRNGKey(0)
    kx, kp = jax.random.split(key)
    x = jax.random.normal(kx, (B, H * W, dim), jnp.float32)
    params = init_params(kp, dim)

    out = patch_merging_forward(x, (H, W), params)
    out = jax.block_until_ready(out)

    ref = patch_merging_reference(x, (H, W), params)
    assert out.shape == (B, (H // 2) * (W // 2), 2 * dim), out.shape
    # bf16 MXU operands -> slightly looser tolerance vs the f32 reference.
    assert jnp.allclose(out, ref, atol=2e-2, rtol=2e-2), "mismatch vs reference"
    print("KERNEL_OK")
</pallas_src>

<mosaic_0001>
module attributes {stable_mosaic.version = 11 : i64} {
  func.func @_patch_merging_kernel(%arg0: i32, %arg1: memref<4x2x64x16xbf16, #tpu.memory_space<vmem>>, %arg2: memref<16x128xbf16, #tpu.memory_space<vmem>>, %arg3: memref<1x128xf32, #tpu.memory_space<vmem>>, %arg4: memref<9x128xf32, #tpu.memory_space<vmem>>, %arg5: memref<1x128xf32, #tpu.memory_space<vmem>>, %arg6: memref<128x32xbf16, #tpu.memory_space<vmem>>, %arg7: memref<1x32xf32, #tpu.memory_space<vmem>>, %arg8: memref<2x64x32xf32, #tpu.memory_space<vmem>>) attributes {dimension_semantics = [#tpu.dimension_semantics<parallel>], iteration_bounds = array<i64: 1>, scalar_prefetch = 0 : i64, scratch_operands = 0 : i64, tpu.core_type = #tpu.core_type<tc>, window_params = [{transform_indices = @transform_0, window_bounds = array<i64: 4, 2, 64, 16>}, {pipeline_mode = #tpu.pipeline_mode<synchronous>, transform_indices = @transform_1, window_bounds = array<i64: 16, 128>}, {pipeline_mode = #tpu.pipeline_mode<synchronous>, transform_indices = @transform_2, window_bounds = array<i64: 1, 128>}, {pipeline_mode = #tpu.pipeline_mode<synchronous>, transform_indices = @transform_3, window_bounds = array<i64: 9, 128>}, {pipeline_mode = #tpu.pipeline_mode<synchronous>, transform_indices = @transform_4, window_bounds = array<i64: 1, 128>}, {pipeline_mode = #tpu.pipeline_mode<synchronous>, transform_indices = @transform_5, window_bounds = array<i64: 128, 32>}, {pipeline_mode = #tpu.pipeline_mode<synchronous>, transform_indices = @transform_6, window_bounds = array<i64: 1, 32>}, {transform_indices = @transform_7, window_bounds = array<i64: 2, 64, 32>}]} {
    %c0 = arith.constant 0 : index
    %c0_0 = arith.constant 0 : index
    %c0_1 = arith.constant 0 : index
    %c0_2 = arith.constant 0 : index
    %0 = vector.load %arg1[%c0, %c0_0, %c0_1, %c0_2] : memref<4x2x64x16xbf16, #tpu.memory_space<vmem>>, vector<4x2x64x16xbf16>
    %1 = vector.shape_cast %0 : vector<4x2x64x16xbf16> to vector<512x16xbf16>
    %c0_3 = arith.constant 0 : index
    %c0_4 = arith.constant 0 : index
    %2 = vector.load %arg2[%c0_3, %c0_4] : memref<16x128xbf16, #tpu.memory_space<vmem>>, vector<16x128xbf16>
    %cst = arith.constant dense<0.000000e+00> : vector<512x128xf32>
    %3 = tpu.matmul %1, %2, %cst {dimension_numbers = #tpu.dot_dimension_numbers<[1], [0], [0], [1], [0, 0, 1, 1], [], []>} : vector<512x16xbf16>, vector<16x128xbf16>, vector<512x128xf32> -> vector<512x128xf32>
    %c0_5 = arith.constant 0 : index
    %c0_6 = arith.constant 0 : index
    %4 = vector.load %arg3[%c0_5, %c0_6] : memref<1x128xf32, #tpu.memory_space<vmem>>, vector<1x128xf32>
    %5 = vector.broadcast %4 : vector<1x128xf32> to vector<512x128xf32>
    %6 = arith.addf %3, %5 : vector<512x128xf32>
    %cst_7 = arith.constant 0.000000e+00 : f32
    %7 = vector.broadcast %cst_7 : f32 to vector<512x128xf32>
    %8 = arith.maximumf %6, %7 : vector<512x128xf32>
    %9 = vector.shape_cast %8 : vector<512x128xf32> to vector<8x8x8x128xf32>
    %10 = vector.extract_strided_slice %9 {offsets = [0, 0, 0, 0], sizes = [2, 8, 8, 128], strides = [1, 1, 1, 1]} : vector<8x8x8x128xf32> to vector<2x8x8x128xf32>
    %11 = vector.extract_strided_slice %9 {offsets = [2, 0, 0, 0], sizes = [2, 8, 8, 128], strides = [1, 1, 1, 1]} : vector<8x8x8x128xf32> to vector<2x8x8x128xf32>
    %12 = vector.extract_strided_slice %9 {offsets = [4, 0, 0, 0], sizes = [2, 8, 8, 128], strides = [1, 1, 1, 1]} : vector<8x8x8x128xf32> to vector<2x8x8x128xf32>
    %13 = vector.extract_strided_slice %9 {offsets = [6, 0, 0, 0], sizes = [2, 8, 8, 128], strides = [1, 1, 1, 1]} : vector<8x8x8x128xf32> to vector<2x8x8x128xf32>
    %cst_8 = arith.constant 0.000000e+00 : f32
    %14 = vector.broadcast %cst_8 : f32 to vector<2x1x8x128xf32>
    %cst_9 = arith.constant 0.000000e+00 : f32
    %15 = vector.broadcast %cst_9 : f32 to vector<2x8x1x128xf32>
    %c0_10 = arith.constant 0 : index
    %c0_11 = arith.constant 0 : index
    %16 = vector.load %arg4[%c0_10, %c0_11] : memref<9x128xf32, #tpu.memory_space<vmem>>, vector<9x128xf32>
    %17 = vector.extract_strided_slice %16 {offsets = [4, 0], sizes = [1, 128], strides = [1, 1]} : vector<9x128xf32> to vector<1x128xf32>
    %18 = vector.shape_cast %17 : vector<1x128xf32> to vector<128xf32>
    %19 = vector.shape_cast %18 : vector<128xf32> to vector<1x1x1x128xf32>
    %20 = vector.broadcast %19 : vector<1x1x1x128xf32> to vector<2x8x8x128xf32>
    %21 = arith.mulf %10, %20 : vector<2x8x8x128xf32>
    %22 = vector.extract_strided_slice %16 {offsets = [7, 0], sizes = [1, 128], strides = [1, 1]} : vector<9x128xf32> to vector<1x128xf32>
    %23 = vector.shape_cast %22 : vector<1x128xf32> to vector<128xf32>
    %24 = vector.shape_cast %23 : vector<128xf32> to vector<1x1x1x128xf32>
    %25 = vector.broadcast %24 : vector<1x1x1x128xf32> to vector<2x8x8x128xf32>
    %26 = arith.mulf %12, %25 : vector<2x8x8x128xf32>
    %27 = arith.addf %21, %26 : vector<2x8x8x128xf32>
    %28 = vector.extract_strided_slice %12 {offsets = [0, 0, 0, 0], sizes = [2, 7, 8, 128], strides = [1, 1, 1, 1]} : vector<2x8x8x128xf32> to vector<2x7x8x128xf32>
    %29 = tpu.concatenate %14, %28 in 1 : vector<2x1x8x128xf32>, vector<2x7x8x128xf32> -> vector<2x8x8x128xf32>
    %30 = vector.extract_strided_slice %16 {offsets = [1, 0], sizes = [1, 128], strides = [1, 1]} : vector<9x128xf32> to vector<1x128xf32>
    %31 = vector.shape_cast %30 : vector<1x128xf32> to vector<128xf32>
    %32 = vector.shape_cast %31 : vector<128xf32> to vector<1x1x1x128xf32>
    %33 = vector.broadcast %32 : vector<1x1x1x128xf32> to vector<2x8x8x128xf32>
    %34 = arith.mulf %29, %33 : vector<2x8x8x128xf32>
    %35 = arith.addf %27, %34 : vector<2x8x8x128xf32>
    %36 = vector.extract_strided_slice %16 {offsets = [5, 0], sizes = [1, 128], strides = [1, 1]} : vector<9x128xf32> to vector<1x128xf32>
    %37 = vector.shape_cast %36 : vector<1x128xf32> to vector<128xf32>
    %38 = vector.shape_cast %37 : vector<128xf32> to vector<1x1x1x128xf32>
    %39 = vector.broadcast %38 : vector<1x1x1x128xf32> to vector<2x8x8x128xf32>
    %40 = arith.mulf %11, %39 : vector<2x8x8x128xf32>
    %41 = arith.addf %35, %40 : vector<2x8x8x128xf32>
    %42 = vector.extract_strided_slice %11 {offsets = [0, 0, 0, 0], sizes = [2, 8, 7, 128], strides = [1, 1, 1, 1]} : vector<2x8x8x128xf32> to vector<2x8x7x128xf32>
    %43 = tpu.concatenate %15, %42 in 2 : vector<2x8x1x128xf32>, vector<2x8x7x128xf32> -> vector<2x8x8x128xf32>
    %44 = vector.extract_strided_slice %16 {offsets = [3, 0], sizes = [1, 128], strides = [1, 1]} : vector<9x128xf32> to vector<1x128xf32>
    %45 = vector.shape_cast %44 : vector<1x128xf32> to vector<128xf32>
    %46 = vector.shape_cast %45 : vector<128xf32> to vector<1x1x1x128xf32>
    %47 = vector.broadcast %46 : vector<1x1x1x128xf32> to vector<2x8x8x128xf32>
    %48 = arith.mulf %43, %47 : vector<2x8x8x128xf32>
    %49 = arith.addf %41, %48 : vector<2x8x8x128xf32>
    %50 = vector.extract_strided_slice %16 {offsets = [8, 0], sizes = [1, 128], strides = [1, 1]} : vector<9x128xf32> to vector<1x128xf32>
    %51 = vector.shape_cast %50 : vector<1x128xf32> to vector<128xf32>
    %52 = vector.shape_cast %51 : vector<128xf32> to vector<1x1x1x128xf32>
    %53 = vector.broadcast %52 : vector<1x1x1x128xf32> to vector<2x8x8x128xf32>
    %54 = arith.mulf %13, %53 : vector<2x8x8x128xf32>
    %55 = arith.addf %49, %54 : vector<2x8x8x128xf32>
    %56 = vector.extract_strided_slice %13 {offsets = [0, 0, 0, 0], sizes = [2, 7, 8, 128], strides = [1, 1, 1, 1]} : vector<2x8x8x128xf32> to vector<2x7x8x128xf32>
    %57 = tpu.concatenate %14, %56 in 1 : vector<2x1x8x128xf32>, vector<2x7x8x128xf32> -> vector<2x8x8x128xf32>
    %58 = vector.extract_strided_slice %16 {offsets = [2, 0], sizes = [1, 128], strides = [1, 1]} : vector<9x128xf32> to vector<1x128xf32>
    %59 = vector.shape_cast %58 : vector<1x128xf32> to vector<128xf32>
    %60 = vector.shape_cast %59 : vector<128xf32> to vector<1x1x1x128xf32>
    %61 = vector.broadcast %60 : vector<1x1x1x128xf32> to vector<2x8x8x128xf32>
    %62 = arith.mulf %57, %61 : vector<2x8x8x128xf32>
    %63 = arith.addf %55, %62 : vector<2x8x8x128xf32>
    %64 = vector.extract_strided_slice %13 {offsets = [0, 0, 0, 0], sizes = [2, 8, 7, 128], strides = [1, 1, 1, 1]} : vector<2x8x8x128xf32> to vector<2x8x7x128xf32>
    %65 = tpu.concatenate %15, %64 in 2 : vector<2x8x1x128xf32>, vector<2x8x7x128xf32> -> vector<2x8x8x128xf32>
    %66 = vector.extract_strided_slice %16 {offsets = [6, 0], sizes = [1, 128], strides = [1, 1]} : vector<9x128xf32> to vector<1x128xf32>
    %67 = vector.shape_cast %66 : vector<1x128xf32> to vector<128xf32>
    %68 = vector.shape_cast %67 : vector<128xf32> to vector<1x1x1x128xf32>
    %69 = vector.broadcast %68 : vector<1x1x1x128xf32> to vector<2x8x8x128xf32>
    %70 = arith.mulf %65, %69 : vector<2x8x8x128xf32>
    %71 = arith.addf %63, %70 : vector<2x8x8x128xf32>
    %72 = vector.extract_strided_slice %65 {offsets = [0, 0, 0, 0], sizes = [2, 7, 8, 128], strides = [1, 1, 1, 1]} : vector<2x8x8x128xf32> to vector<2x7x8x128xf32>
    %73 = tpu.concatenate %14, %72 in 1 : vector<2x1x8x128xf32>, vector<2x7x8x128xf32> -> vector<2x8x8x128xf32>
    %74 = vector.extract_strided_slice %16 {offsets = [0, 0], sizes = [1, 128], strides = [1, 1]} : vector<9x128xf32> to vector<1x128xf32>
    %75 = vector.shape_cast %74 : vector<1x128xf32> to vector<128xf32>
    %76 = vector.shape_cast %75 : vector<128xf32> to vector<1x1x1x128xf32>
    %77 = vector.broadcast %76 : vector<1x1x1x128xf32> to vector<2x8x8x128xf32>
    %78 = arith.mulf %73, %77 : vector<2x8x8x128xf32>
    %79 = arith.addf %71, %78 : vector<2x8x8x128xf32>
    %c0_12 = arith.constant 0 : index
    %c0_13 = arith.constant 0 : index
    %80 = vector.load %arg5[%c0_12, %c0_13] : memref<1x128xf32, #tpu.memory_space<vmem>>, vector<1x128xf32>
    %81 = vector.shape_cast %80 : vector<1x128xf32> to vector<1x1x1x128xf32>
    %82 = vector.broadcast %81 : vector<1x1x1x128xf32> to vector<2x8x8x128xf32>
    %83 = arith.addf %79, %82 : vector<2x8x8x128xf32>
    %cst_14 = arith.constant 0.000000e+00 : f32
    %84 = vector.broadcast %cst_14 : f32 to vector<2x8x8x128xf32>
    %85 = arith.maximumf %83, %84 : vector<2x8x8x128xf32>
    %86 = vector.shape_cast %85 : vector<2x8x8x128xf32> to vector<128x128xf32>
    %87 = arith.truncf %86 : vector<128x128xf32> to vector<128x128xbf16>
    %c0_15 = arith.constant 0 : index
    %c0_16 = arith.constant 0 : index
    %88 = vector.load %arg6[%c0_15, %c0_16] : memref<128x32xbf16, #tpu.memory_space<vmem>>, vector<128x32xbf16>
    %cst_17 = arith.constant dense<0.000000e+00> : vector<128x32xf32>
    %89 = tpu.matmul %87, %88, %cst_17 {dimension_numbers = #tpu.dot_dimension_numbers<[1], [0], [0], [1], [0, 0, 1, 1], [], []>} : vector<128x128xbf16>, vector<128x32xbf16>, vector<128x32xf32> -> vector<128x32xf32>
    %c0_18 = arith.constant 0 : index
    %c0_19 = arith.constant 0 : index
    %90 = vector.load %arg7[%c0_18, %c0_19] : memref<1x32xf32, #tpu.memory_space<vmem>>, vector<1x32xf32>
    %91 = vector.broadcast %90 : vector<1x32xf32> to vector<128x32xf32>
    %92 = arith.addf %89, %91 : vector<128x32xf32>
    %93 = vector.shape_cast %92 : vector<128x32xf32> to vector<2x64x32xf32>
    %c0_20 = arith.constant 0 : index
    %c0_21 = arith.constant 0 : index
    %c0_22 = arith.constant 0 : index
    %94 = vector.load %arg8[%c0_20, %c0_21, %c0_22] : memref<2x64x32xf32, #tpu.memory_space<vmem>>, vector<2x64x32xf32>
    tpu.vector_store %arg8[%c0_20, %c0_21, %c0_22], %93 {strides = array<i32>} : memref<2x64x32xf32, #tpu.memory_space<vmem>>, vector<2x64x32xf32>,
    return
  }
  func.func @transform_0(%arg0: i32) -> (i32, i32, i32, i32) {
    %c0_i32 = arith.constant 0 : i32
    %c0_i32_0 = arith.constant 0 : i32
    %c0_i32_1 = arith.constant 0 : i32
    %c0_i32_2 = arith.constant 0 : i32
    return %c0_i32, %arg0, %c0_i32_0, %c0_i32_1 : i32, i32, i32, i32
  }
  func.func @transform_1(%arg0: i32) -> (i32, i32) {
    %c0_i32 = arith.constant 0 : i32
    %c0_i32_0 = arith.constant 0 : i32
    %c0_i32_1 = arith.constant 0 : i32
    return %c0_i32, %c0_i32_0 : i32, i32
  }
  func.func @transform_2(%arg0: i32) -> (i32, i32) {
    %c0_i32 = arith.constant 0 : i32
    %c0_i32_0 = arith.constant 0 : i32
    %c0_i32_1 = arith.constant 0 : i32
    return %c0_i32, %c0_i32_0 : i32, i32
  }
  func.func @transform_3(%arg0: i32) -> (i32, i32) {
    %c0_i32 = arith.constant 0 : i32
    %c0_i32_0 = arith.constant 0 : i32
    %c0_i32_1 = arith.constant 0 : i32
    return %c0_i32, %c0_i32_0 : i32, i32
  }
  func.func @transform_4(%arg0: i32) -> (i32, i32) {
    %c0_i32 = arith.constant 0 : i32
    %c0_i32_0 = arith.constant 0 : i32
    %c0_i32_1 = arith.constant 0 : i32
    return %c0_i32, %c0_i32_0 : i32, i32
  }
  func.func @transform_5(%arg0: i32) -> (i32, i32) {
    %c0_i32 = arith.constant 0 : i32
    %c0_i32_0 = arith.constant 0 : i32
    %c0_i32_1 = arith.constant 0 : i32
    return %c0_i32, %c0_i32_0 : i32, i32
  }
  func.func @transform_6(%arg0: i32) -> (i32, i32) {
    %c0_i32 = arith.constant 0 : i32
    %c0_i32_0 = arith.constant 0 : i32
    %c0_i32_1 = arith.constant 0 : i32
    return %c0_i32, %c0_i32_0 : i32, i32
  }
  func.func @transform_7(%arg0: i32) -> (i32, i32, i32) {
    %c0_i32 = arith.constant 0 : i32
    %c0_i32_0 = arith.constant 0 : i32
    %c0_i32_1 = arith.constant 0 : i32
    return %arg0, %c0_i32, %c0_i32_0 : i32, i32, i32
  }
}

</mosaic_0001>

<llo_original>
// kernel: tpu_custom_call.1
$region0: #{tpu_custom_call.1}
  #allocation0 [shape = 'u32[]', space=smem, size = 0x4, offset = 0x4, fixed_abs, tag = 'smem constant byte address 0x4 - core index']
  #allocation1 [shape = 'u32[144,128]{1,0:T(1,128)}', space=vmem, size = 0x12000, scoped, tag = 'internal scratch']
  %s0 = inlined_call_operand.vmem [shape: bf16[4,2,64,16], index: 0, kind: input, shape index: {}]
  %s1 = inlined_call_operand.vmem [shape: bf16[16,128], index: 1, kind: input, shape index: {}]
  %s2 = inlined_call_operand.vmem [shape: f32[1,128], index: 2, kind: input, shape index: {}]
  %s3 = inlined_call_operand.vmem [shape: f32[9,128], index: 3, kind: input, shape index: {}]
  %s4 = inlined_call_operand.vmem [shape: f32[1,128], index: 4, kind: input, shape index: {}]
  %s5 = inlined_call_operand.vmem [shape: bf16[128,32], index: 5, kind: input, shape index: {}]
  %s6 = inlined_call_operand.vmem [shape: f32[1,32], index: 6, kind: input, shape index: {}]
  %s7 = inlined_call_operand.vmem [shape: f32[2,64,32], index: 7, kind: output, shape index: {}]
  %s8 = sld [smem:[#allocation0]]
  $region38: #{tpu_custom_call.1} parent=0
    _
  %s10 = ssub.s32 1, %s8
  %s11 = scalar_select 0, %s10, %s8
  // Predicated region
  $region2: #{tpu_custom_call.1} parent=0 // pred_check
    _
  $region3: #{tpu_custom_call.1} parent=0 // pred_check_branch
    %13 = sbr.rel (0) target = $region5
  $region4: #{tpu_custom_call.1} parent=0 // pred_region
    _
  $region5: #{tpu_custom_call.1} parent=0 // pred_fallthru
    _
  // Predicated region
  $region6: #{tpu_custom_call.1} parent=0 // pred_check
    _
  $region7: #{tpu_custom_call.1} parent=0 // pred_check_branch
    %15 = sbr.rel (0) target = $region9
  $region8: #{tpu_custom_call.1} parent=0 // pred_region
    _
  $region9: #{tpu_custom_call.1} parent=0 // pred_fallthru
    _
  // Predicated region
  $region10: #{tpu_custom_call.1} parent=0 // pred_check
    _
  $region11: #{tpu_custom_call.1} parent=0 // pred_check_branch
    %17 = sbr.rel (0) target = $region13
  $region12: #{tpu_custom_call.1} parent=0 // pred_region
    _
  $region13: #{tpu_custom_call.1} parent=0 // pred_fallthru
    _
  // Predicated region
  $region14: #{tpu_custom_call.1} parent=0 // pred_check
    _
  $region15: #{tpu_custom_call.1} parent=0 // pred_check_branch
    %19 = sbr.rel (0) target = $region17
  $region16: #{tpu_custom_call.1} parent=0 // pred_region
    _
  $region17: #{tpu_custom_call.1} parent=0 // pred_fallthru
    _
  // Predicated region
  $region18: #{tpu_custom_call.1} parent=0 // pred_check
    _
  $region19: #{tpu_custom_call.1} parent=0 // pred_check_branch
    %21 = sbr.rel (0) target = $region21
  $region20: #{tpu_custom_call.1} parent=0 // pred_region
    _
  $region21: #{tpu_custom_call.1} parent=0 // pred_fallthru
    _
  // Predicated region
  $region22: #{tpu_custom_call.1} parent=0 // pred_check
    _
  $region23: #{tpu_custom_call.1} parent=0 // pred_check_branch
    %23 = sbr.rel (0) target = $region25
  $region24: #{tpu_custom_call.1} parent=0 // pred_region
    _
  $region25: #{tpu_custom_call.1} parent=0 // pred_fallthru
    _
  // Predicated region
  $region26: #{tpu_custom_call.1} parent=0 // pred_check
    _
  $region27: #{tpu_custom_call.1} parent=0 // pred_check_branch
    %25 = sbr.rel (0) target = $region29
  $region28: #{tpu_custom_call.1} parent=0 // pred_region
    _
  $region29: #{tpu_custom_call.1} parent=0 // pred_fallthru
    _
  %v27 = vld [vmem:[%s0] sm:$0xf]
  %v28 = vld [vmem:[%s0 + $0x4] sm:$0xf]
  %v29 = vld [vmem:[%s0 + $0x8] sm:$0xf]
  %v30 = vld [vmem:[%s0 + $0xc] sm:$0xf]
  %v31 = vld [vmem:[%s0 + $0x10] sm:$0xf]
  %v32 = vld [vmem:[%s0 + $0x14] sm:$0xf]
  %v33 = vld [vmem:[%s0 + $0x18] sm:$0xf]
  %v34 = vld [vmem:[%s0 + $0x1c] sm:$0xf]
  %v35 = vld [vmem:[%s0 + $0x20] sm:$0xf]
  %v36 = vld [vmem:[%s0 + $0x24] sm:$0xf]
  %v37 = vld [vmem:[%s0 + $0x28] sm:$0xf]
  %v38 = vld [vmem:[%s0 + $0x2c] sm:$0xf]
  %v39 = vld [vmem:[%s0 + $0x30] sm:$0xf]
  %v40 = vld [vmem:[%s0 + $0x34] sm:$0xf]
  %v41 = vld [vmem:[%s0 + $0x38] sm:$0xf]
  %v42 = vld [vmem:[%s0 + $0x3c] sm:$0xf]
  %v43 = vld [vmem:[%s0 + $0x40] sm:$0xf]
  %v44 = vld [vmem:[%s0 + $0x44] sm:$0xf]
  %v45 = vld [vmem:[%s0 + $0x48] sm:$0xf]
  %v46 = vld [vmem:[%s0 + $0x4c] sm:$0xf]
  %v47 = vld [vmem:[%s0 + $0x50] sm:$0xf]
  %v48 = vld [vmem:[%s0 + $0x54] sm:$0xf]
  %v49 = vld [vmem:[%s0 + $0x58] sm:$0xf]
  %v50 = vld [vmem:[%s0 + $0x5c] sm:$0xf]
  %v51 = vld [vmem:[%s0 + $0x60] sm:$0xf]
  %v52 = vld [vmem:[%s0 + $0x64] sm:$0xf]
  %v53 = vld [vmem:[%s0 + $0x68] sm:$0xf]
  %v54 = vld [vmem:[%s0 + $0x6c] sm:$0xf]
  %v55 = vld [vmem:[%s0 + $0x70] sm:$0xf]
  %v56 = vld [vmem:[%s0 + $0x74] sm:$0xf]
  %v57 = vld [vmem:[%s0 + $0x78] sm:$0xf]
  %v58 = vld [vmem:[%s0 + $0x7c] sm:$0xf]
  %v59 = vld [vmem:[%s0 + $0x80] sm:$0xf]
  %v60 = vld [vmem:[%s0 + $0x84] sm:$0xf]
  %v61 = vld [vmem:[%s0 + $0x88] sm:$0xf]
  %v62 = vld [vmem:[%s0 + $0x8c] sm:$0xf]
  %v63 = vld [vmem:[%s0 + $0x90] sm:$0xf]
  %v64 = vld [vmem:[%s0 + $0x94] sm:$0xf]
  %v65 = vld [vmem:[%s0 + $0x98] sm:$0xf]
  %v66 = vld [vmem:[%s0 + $0x9c] sm:$0xf]
  %v67 = vld [vmem:[%s0 + $0xa0] sm:$0xf]
  %v68 = vld [vmem:[%s0 + $0xa4] sm:$0xf]
  %v69 = vld [vmem:[%s0 + $0xa8] sm:$0xf]
  %v70 = vld [vmem:[%s0 + $0xac] sm:$0xf]
  %v71 = vld [vmem:[%s0 + $0xb0] sm:$0xf]
  %v72 = vld [vmem:[%s0 + $0xb4] sm:$0xf]
  %v73 = vld [vmem:[%s0 + $0xb8] sm:$0xf]
  %v74 = vld [vmem:[%s0 + $0xbc] sm:$0xf]
  %v75 = vld [vmem:[%s0 + $0xc0] sm:$0xf]
  %v76 = vld [vmem:[%s0 + $0xc4] sm:$0xf]
  %v77 = vld [vmem:[%s0 + $0xc8] sm:$0xf]
  %v78 = vld [vmem:[%s0 + $0xcc] sm:$0xf]
  %v79 = vld [vmem:[%s0 + $0xd0] sm:$0xf]
  %v80 = vld [vmem:[%s0 + $0xd4] sm:$0xf]
  %v81 = vld [vmem:[%s0 + $0xd8] sm:$0xf]
  %v82 = vld [vmem:[%s0 + $0xdc] sm:$0xf]
  %v83 = vld [vmem:[%s0 + $0xe0] sm:$0xf]
  %v84 = vld [vmem:[%s0 + $0xe4] sm:$0xf]
  %v85 = vld [vmem:[%s0 + $0xe8] sm:$0xf]
  %v86 = vld [vmem:[%s0 + $0xec] sm:$0xf]
  %v87 = vld [vmem:[%s0 + $0xf0] sm:$0xf]
  %v88 = vld [vmem:[%s0 + $0xf4] sm:$0xf]
  %v89 = vld [vmem:[%s0 + $0xf8] sm:$0xf]
  %v90 = vld [vmem:[%s0 + $0xfc] sm:$0xf]
  %v91 = vld [vmem:[%s1] sm:$0xf]
  %v92 = vld [vmem:[%s1 + $0x4] sm:$0xf]
  %v93 = vld [vmem:[%s2] sm:$0x1]
  %v95 = vlaneseq
  %v96 = vshrl.u32 %v95, 7
  %v97 = vsub.s32 0, %v96
  %v98 = vrot.slane %v93, %v97
  %v164 = vunpack.c.l.b16 %v27
  %v165 = vunpack.c.l.b16 %v28
  %v166 = vunpack.c.l.b16 %v29
  %v167 = vunpack.c.l.b16 %v30
  %v168 = vunpack.c.l.b16 %v31
  %v169 = vunpack.c.l.b16 %v32
  %v170 = vunpack.c.l.b16 %v33
  %v171 = vunpack.c.l.b16 %v34
  %v172 = vunpack.c.l.b16 %v35
  %v173 = vunpack.c.l.b16 %v36
  %v174 = vunpack.c.l.b16 %v37
  %v175 = vunpack.c.l.b16 %v38
  %v176 = vunpack.c.l.b16 %v39
  %v177 = vunpack.c.l.b16 %v40
  %v178 = vunpack.c.l.b16 %v41
  %v179 = vunpack.c.l.b16 %v42
  %v180 = vunpack.c.l.b16 %v43
  %v181 = vunpack.c.l.b16 %v44
  %v182 = vunpack.c.l.b16 %v45
  %v183 = vunpack.c.l.b16 %v46
  %v184 = vunpack.c.l.b16 %v47
  %v185 = vunpack.c.l.b16 %v48
  %v186 = vunpack.c.l.b16 %v49
  %v187 = vunpack.c.l.b16 %v50
  %v188 = vunpack.c.l.b16 %v51
  %v189 = vunpack.c.l.b16 %v52
  %v190 = vunpack.c.l.b16 %v53
  %v191 = vunpack.c.l.b16 %v54
  %v192 = vunpack.c.l.b16 %v55
  %v193 = vunpack.c.l.b16 %v56
  %v194 = vunpack.c.l.b16 %v57
  %v195 = vunpack.c.l.b16 %v58
  %v196 = vunpack.c.l.b16 %v59
  %v197 = vunpack.c.l.b16 %v60
  %v198 = vunpack.c.l.b16 %v61
  %v199 = vunpack.c.l.b16 %v62
  %v200 = vunpack.c.l.b16 %v63
  %v201 = vunpack.c.l.b16 %v64
  %v202 = vunpack.c.l.b16 %v65
  %v203 = vunpack.c.l.b16 %v66
  %v204 = vunpack.c.l.b16 %v67
  %v205 = vunpack.c.l.b16 %v68
  %v206 = vunpack.c.l.b16 %v69
  %v207 = vunpack.c.l.b16 %v70
  %v208 = vunpack.c.l.b16 %v71
  %v209 = vunpack.c.l.b16 %v72
  %v210 = vunpack.c.l.b16 %v73
  %v211 = vunpack.c.l.b16 %v74
  %v212 = vunpack.c.l.b16 %v75
  %v213 = vunpack.c.l.b16 %v76
  %v214 = vunpack.c.l.b16 %v77
  %v215 = vunpack.c.l.b16 %v78
  %v216 = vunpack.c.l.b16 %v79
  %v217 = vunpack.c.l.b16 %v80
  %v218 = vunpack.c.l.b16 %v81
  %v219 = vunpack.c.l.b16 %v82
  %v220 = vunpack.c.l.b16 %v83
  %v221 = vunpack.c.l.b16 %v84
  %v222 = vunpack.c.l.b16 %v85
  %v223 = vunpack.c.l.b16 %v86
  %v224 = vunpack.c.l.b16 %v87
  %v225 = vunpack.c.l.b16 %v88
  %v226 = vunpack.c.l.b16 %v89
  %v227 = vunpack.c.l.b16 %v90
  %v228 = vpack.c.b16 %v165, %v164
  %v229 = vpack.c.b16 %v167, %v166
  %v230 = vpack.c.b16 %v169, %v168
  %v231 = vpack.c.b16 %v171, %v170
  %v232 = vpack.c.b16 %v173, %v172
  %v233 = vpack.c.b16 %v175, %v174
  %v234 = vpack.c.b16 %v177, %v176
  %v235 = vpack.c.b16 %v179, %v178
  %v236 = vpack.c.b16 %v181, %v180
  %v237 = vpack.c.b16 %v183, %v182
  %v238 = vpack.c.b16 %v185, %v184
  %v239 = vpack.c.b16 %v187, %v186
  %v240 = vpack.c.b16 %v189, %v188
  %v241 = vpack.c.b16 %v191, %v190
  %v242 = vpack.c.b16 %v193, %v192
  %v243 = vpack.c.b16 %v195, %v194
  %v244 = vpack.c.b16 %v197, %v196
  %v245 = vpack.c.b16 %v199, %v198
  %v246 = vpack.c.b16 %v201, %v200
  %v247 = vpack.c.b16 %v203, %v202
  %v248 = vpack.c.b16 %v205, %v204
  %v249 = vpack.c.b16 %v207, %v206
  %v250 = vpack.c.b16 %v209, %v208
  %v251 = vpack.c.b16 %v211, %v210
  %v252 = vpack.c.b16 %v213, %v212
  %v253 = vpack.c.b16 %v215, %v214
  %v254 = vpack.c.b16 %v217, %v216
  %v255 = vpack.c.b16 %v219, %v218
  %v256 = vpack.c.b16 %v221, %v220
  %v257 = vpack.c.b16 %v223, %v222
  %v258 = vpack.c.b16 %v225, %v224
  %v259 = vpack.c.b16 %v227, %v226
  %v262 = vunpack.c.l.b16 %v91
  %v263 = vunpack.c.l.b16 %v92
  %v264 = vpack.c.b16 %v263, %v262
  %vm266 = vcmask 130048
  %v268 = vsel %vm266, %v228, 0
  %v271 = vsel %vm266, %v229, 0
  %v274 = vsel %vm266, %v230, 0
  %v277 = vsel %vm266, %v231, 0
  %v280 = vsel %vm266, %v232, 0
  %v283 = vsel %vm266, %v233, 0
  %v286 = vsel %vm266, %v234, 0
  %v289 = vsel %vm266, %v235, 0
  %v292 = vsel %vm266, %v236, 0
  %v295 = vsel %vm266, %v237, 0
  %v298 = vsel %vm266, %v238, 0
  %v301 = vsel %vm266, %v239, 0
  %v304 = vsel %vm266, %v240, 0
  %v307 = vsel %vm266, %v241, 0
  %v310 = vsel %vm266, %v242, 0
  %v313 = vsel %vm266, %v243, 0
  %v316 = vsel %vm266, %v244, 0
  %v319 = vsel %vm266, %v245, 0
  %v322 = vsel %vm266, %v246, 0
  %v325 = vsel %vm266, %v247, 0
  %v328 = vsel %vm266, %v248, 0
  %v331 = vsel %vm266, %v249, 0
  %v334 = vsel %vm266, %v250, 0
  %v337 = vsel %vm266, %v251, 0
  %v340 = vsel %vm266, %v252, 0
  %v343 = vsel %vm266, %v253, 0
  %v346 = vsel %vm266, %v254, 0
  %v349 = vsel %vm266, %v255, 0
  %v352 = vsel %vm266, %v256, 0
  %v355 = vsel %vm266, %v257, 0
  %v358 = vsel %vm266, %v258, 0
  %v361 = vsel %vm266, %v259, 0
  %363 = vmatprep.subr.bf16.mxu0 0
  %364 = vmatpush1.bf16.msra.mxu0 %v264
  %365 = vmatprep.subr.bf16.mxu0 0
  %366 = vmatpush1.bf16.msra.mxu0 0
  %367 = vmatprep.subr.bf16.mxu0 0
  %368 = vmatpush1.bf16.msra.mxu0 0
  %369 = vmatprep.subr.bf16.mxu0 0
  %370 = vmatpush1.bf16.msra.mxu0 0
  %371 = vmatprep.subr.bf16.mxu0 0
  %372 = vmatpush1.bf16.msra.mxu0 0
  %373 = vmatprep.subr.bf16.mxu0 0
  %374 = vmatpush1.bf16.msra.mxu0 0
  %375 = vmatprep.subr.bf16.mxu0 0
  %376 = vmatpush1.bf16.msra.mxu0 0
  %377 = vmatprep.subr.bf16.mxu0 0
  %378 = vmatpush1.bf16.msra.mxu0 0
  %379 = vmatprep.subr.bf16.mxu0 0
  %380 = vmatpush1.bf16.msra.mxu0 0
  %381 = vmatprep.subr.bf16.mxu0 0
  %382 = vmatpush1.bf16.msra.mxu0 0
  %383 = vmatprep.subr.bf16.mxu0 0
  %384 = vmatpush1.bf16.msra.mxu0 0
  %385 = vmatprep.subr.bf16.mxu0 0
  %386 = vmatpush1.bf16.msra.mxu0 0
  %387 = vmatprep.subr.bf16.mxu0 0
  %388 = vmatpush1.bf16.msra.mxu0 0
  %389 = vmatprep.subr.bf16.mxu0 0
  %390 = vmatpush1.bf16.msra.mxu0 0
  %391 = vmatprep.subr.bf16.mxu0 0
  %392 = vmatpush1.bf16.msra.mxu0 0
  %393 = vmatprep.subr.bf16.mxu0 0
  %394 = vmatpush1.bf16.msra.mxu0 0
  %395 = vmatprep.mubr.bf16.mxu0 0
  %396 = vmatmul.mubr.bf16.gmra.mrb[0].mxu0 %v268
  %v397 = vpop.f32.mrb[0].mxu0
  %v398 = vadd.f32 %v98, %v397
  %v399 = vpop.f32.mrb[0].mxu0
  %v400 = vpop.f32.mrb[0].mxu0
  %v401 = vadd.f32 %v98, %v400
  %v402 = vpop.f32.mrb[0].mxu0
  %403 = vmatprep.mubr.bf16.mxu0 0
  %404 = vmatmul.mubr.bf16.gmra.mrb[0].mxu0 %v271
  %v405 = vpop.f32.mrb[0].mxu0
  %v406 = vadd.f32 %v98, %v405
  %v407 = vpop.f32.mrb[0].mxu0
  %v408 = vpop.f32.mrb[0].mxu0
  %v409 = vadd.f32 %v98, %v408
  %v410 = vpop.f32.mrb[0].mxu0
  %411 = vmatprep.mubr.bf16.mxu0 0
  %412 = vmatmul.mubr.bf16.gmra.mrb[0].mxu0 %v274
  %v413 = vpop.f32.mrb[0].mxu0
  %v414 = vadd.f32 %v98, %v413
  %v415 = vpop.f32.mrb[0].mxu0
  %v416 = vpop.f32.mrb[0].mxu0
  %v417 = vadd.f32 %v98, %v416
  %v418 = vpop.f32.mrb[0].mxu0
  %419 = vmatprep.mubr.bf16.mxu0 0
  %420 = vmatmul.mubr.bf16.gmra.mrb[0].mxu0 %v277
  %v421 = vpop.f32.mrb[0].mxu0
  %v422 = vadd.f32 %v98, %v421
  %v423 = vpop.f32.mrb[0].mxu0
  %v424 = vpop.f32.mrb[0].mxu0
  %v425 = vadd.f32 %v98, %v424
  %v426 = vpop.f32.mrb[0].mxu0
  %427 = vmatprep.mubr.bf16.mxu0 0
  %428 = vmatmul.mubr.bf16.gmra.mrb[0].mxu0 %v280
  %v429 = vpop.f32.mrb[0].mxu0
  %v430 = vadd.f32 %v98, %v429
  %v431 = vpop.f32.mrb[0].mxu0
  %v432 = vpop.f32.mrb[0].mxu0
  %v433 = vadd.f32 %v98, %v432
  %v434 = vpop.f32.mrb[0].mxu0
  %435 = vmatprep.mubr.bf16.mxu0 0
  %436 = vmatmul.mubr.bf16.gmra.mrb[0].mxu0 %v283
  %v437 = vpop.f32.mrb[0].mxu0
  %v438 = vadd.f32 %v98, %v437
  %v439 = vpop.f32.mrb[0].mxu0
  %v440 = vpop.f32.mrb[0].mxu0
  %v441 = vadd.f32 %v98, %v440
  %v442 = vpop.f32.mrb[0].mxu0
  %443 = vmatprep.mubr.bf16.mxu0 0
  %444 = vmatmul.mubr.bf16.gmra.mrb[0].mxu0 %v286
  %v445 = vpop.f32.mrb[0].mxu0
  %v446 = vadd.f32 %v98, %v445
  %v447 = vpop.f32.mrb[0].mxu0
  %v448 = vpop.f32.mrb[0].mxu0
  %v449 = vadd.f32 %v98, %v448
  %v450 = vpop.f32.mrb[0].mxu0
  %451 = vmatprep.mubr.bf16.mxu0 0
  %452 = vmatmul.mubr.bf16.gmra.mrb[0].mxu0 %v289
  %v453 = vpop.f32.mrb[0].mxu0
  %v454 = vadd.f32 %v98, %v453
  %v455 = vpop.f32.mrb[0].mxu0
  %v456 = vpop.f32.mrb[0].mxu0
  %v457 = vadd.f32 %v98, %v456
  %v458 = vpop.f32.mrb[0].mxu0
  %459 = vmatprep.mubr.bf16.mxu0 0
  %460 = vmatmul.mubr.bf16.gmra.mrb[0].mxu0 %v292
  %v461 = vpop.f32.mrb[0].mxu0
  %v462 = vadd.f32 %v98, %v461
  %v463 = vpop.f32.mrb[0].mxu0
  %v464 = vpop.f32.mrb[0].mxu0
  %v465 = vadd.f32 %v98, %v464
  %v466 = vpop.f32.mrb[0].mxu0
  %467 = vmatprep.mubr.bf16.mxu0 0
  %468 = vmatmul.mubr.bf16.gmra.mrb[0].mxu0 %v295
  %v469 = vpop.f32.mrb[0].mxu0
  %v470 = vadd.f32 %v98, %v469
  %v471 = vpop.f32.mrb[0].mxu0
  %v472 = vpop.f32.mrb[0].mxu0
  %v473 = vadd.f32 %v98, %v472
  %v474 = vpop.f32.mrb[0].mxu0
  %475 = vmatprep.mubr.bf16.mxu0 0
  %476 = vmatmul.mubr.bf16.gmra.mrb[0].mxu0 %v298
  %v477 = vpop.f32.mrb[0].mxu0
  %v478 = vadd.f32 %v98, %v477
  %v479 = vpop.f32.mrb[0].mxu0
  %v480 = vpop.f32.mrb[0].mxu0
  %v481 = vadd.f32 %v98, %v480
  %v482 = vpop.f32.mrb[0].mxu0
  %483 = vmatprep.mubr.bf16.mxu0 0
  %484 = vmatmul.mubr.bf16.gmra.mrb[0].mxu0 %v301
  %v485 = vpop.f32.mrb[0].mxu0
  %v486 = vadd.f32 %v98, %v485
  %v487 = vpop.f32.mrb[0].mxu0
  %v488 = vpop.f32.mrb[0].mxu0
  %v489 = vadd.f32 %v98, %v488
  %v490 = vpop.f32.mrb[0].mxu0
  %491 = vmatprep.mubr.bf16.mxu0 0
  %492 = vmatmul.mubr.bf16.gmra.mrb[0].mxu0 %v304
  %v493 = vpop.f32.mrb[0].mxu0
  %v494 = vadd.f32 %v98, %v493
  %v495 = vpop.f32.mrb[0].mxu0
  %v496 = vpop.f32.mrb[0].mxu0
  %v497 = vadd.f32 %v98, %v496
  %v498 = vpop.f32.mrb[0].mxu0
  %499 = vmatprep.mubr.bf16.mxu0 0
  %500 = vmatmul.mubr.bf16.gmra.mrb[0].mxu0 %v307
  %v501 = vpop.f32.mrb[0].mxu0
  %v502 = vadd.f32 %v98, %v501
  %v503 = vpop.f32.mrb[0].mxu0
  %v504 = vpop.f32.mrb[0].mxu0
  %v505 = vadd.f32 %v98, %v504
  %v506 = vpop.f32.mrb[0].mxu0
  %507 = vmatprep.mubr.bf16.mxu0 0
  %508 = vmatmul.mubr.bf16.gmra.mrb[0].mxu0 %v310
  %v509 = vpop.f32.mrb[0].mxu0
  %v510 = vadd.f32 %v98, %v509
  %v511 = vpop.f32.mrb[0].mxu0
  %v512 = vpop.f32.mrb[0].mxu0
  %v513 = vadd.f32 %v98, %v512
  %v514 = vpop.f32.mrb[0].mxu0
  %515 = vmatprep.mubr.bf16.mxu0 0
  %516 = vmatmul.mubr.bf16.gmra.mrb[0].mxu0 %v313
  %v517 = vpop.f32.mrb[0].mxu0
  %v518 = vadd.f32 %v98, %v517
  %v519 = vpop.f32.mrb[0].mxu0
  %v520 = vpop.f32.mrb[0].mxu0
  %v521 = vadd.f32 %v98, %v520
  %v522 = vpop.f32.mrb[0].mxu0
  %523 = vmatprep.mubr.bf16.mxu0 0
  %524 = vmatmul.mubr.bf16.gmra.mrb[0].mxu0 %v316
  %v525 = vpop.f32.mrb[0].mxu0
  %v526 = vadd.f32 %v98, %v525
  %v527 = vpop.f32.mrb[0].mxu0
  %v528 = vpop.f32.mrb[0].mxu0
  %v529 = vadd.f32 %v98, %v528
  %v530 = vpop.f32.mrb[0].mxu0
  %531 = vmatprep.mubr.bf16.mxu0 0
  %532 = vmatmul.mubr.bf16.gmra.mrb[0].mxu0 %v319
  %v533 = vpop.f32.mrb[0].mxu0
  %v534 = vadd.f32 %v98, %v533
  %v535 = vpop.f32.mrb[0].mxu0
  %v536 = vpop.f32.mrb[0].mxu0
  %v537 = vadd.f32 %v98, %v536
  %v538 = vpop.f32.mrb[0].mxu0
  %539 = vmatprep.mubr.bf16.mxu0 0
  %540 = vmatmul.mubr.bf16.gmra.mrb[0].mxu0 %v322
  %v541 = vpop.f32.mrb[0].mxu0
  %v542 = vadd.f32 %v98, %v541
  %v543 = vpop.f32.mrb[0].mxu0
  %v544 = vpop.f32.mrb[0].mxu0
  %v545 = vadd.f32 %v98, %v544
  %v546 = vpop.f32.mrb[0].mxu0
  %547 = vmatprep.mubr.bf16.mxu0 0
  %548 = vmatmul.mubr.bf16.gmra.mrb[0].mxu0 %v325
  %v549 = vpop.f32.mrb[0].mxu0
  %v550 = vadd.f32 %v98, %v549
  %v551 = vpop.f32.mrb[0].mxu0
  %v552 = vpop.f32.mrb[0].mxu0
  %v553 = vadd.f32 %v98, %v552
  %v554 = vpop.f32.mrb[0].mxu0
  %555 = vmatprep.mubr.bf16.mxu0 0
  %556 = vmatmul.mubr.bf16.gmra.mrb[0].mxu0 %v328
  %v557 = vpop.f32.mrb[0].mxu0
  %v558 = vadd.f32 %v98, %v557
  %v559 = vpop.f32.mrb[0].mxu0
  %v560 = vpop.f32.mrb[0].mxu0
  %v561 = vadd.f32 %v98, %v560
  %v562 = vpop.f32.mrb[0].mxu0
  %563 = vmatprep.mubr.bf16.mxu0 0
  %564 = vmatmul.mubr.bf16.gmra.mrb[0].mxu0 %v331
  %v565 = vpop.f32.mrb[0].mxu0
  %v566 = vadd.f32 %v98, %v565
  %v567 = vpop.f32.mrb[0].mxu0
  %v568 = vpop.f32.mrb[0].mxu0
  %v569 = vadd.f32 %v98, %v568
  %v570 = vpop.f32.mrb[0].mxu0
  %571 = vmatprep.mubr.bf16.mxu0 0
  %572 = vmatmul.mubr.bf16.gmra.mrb[0].mxu0 %v334
  %v573 = vpop.f32.mrb[0].mxu0
  %v574 = vadd.f32 %v98, %v573
  %v575 = vpop.f32.mrb[0].mxu0
  %v576 = vpop.f32.mrb[0].mxu0
  %v577 = vadd.f32 %v98, %v576
  %v578 = vpop.f32.mrb[0].mxu0
  %579 = vmatprep.mubr.bf16.mxu0 0
  %580 = vmatmul.mubr.bf16.gmra.mrb[0].mxu0 %v337
  %v581 = vpop.f32.mrb[0].mxu0
  %v582 = vadd.f32 %v98, %v581
  %v583 = vpop.f32.mrb[0].mxu0
  %v584 = vpop.f32.mrb[0].mxu0
  %v585 = vadd.f32 %v98, %v584
  %v586 = vpop.f32.mrb[0].mxu0
  %587 = vmatprep.mubr.bf16.mxu0 0
  %588 = vmatmul.mubr.bf16.gmra.mrb[0].mxu0 %v340
  %v589 = vpop.f32.mrb[0].mxu0
  %v590 = vadd.f32 %v98, %v589
  %v591 = vpop.f32.mrb[0].mxu0
  %v592 = vpop.f32.mrb[0].mxu0
  %v593 = vadd.f32 %v98, %v592
  %v594 = vpop.f32.mrb[0].mxu0
  %595 = vmatprep.mubr.bf16.mxu0 0
  %596 = vmatmul.mubr.bf16.gmra.mrb[0].mxu0 %v343
  %v597 = vpop.f32.mrb[0].mxu0
  %v598 = vadd.f32 %v98, %v597
  %v599 = vpop.f32.mrb[0].mxu0
  %v600 = vpop.f32.mrb[0].mxu0
  %v601 = vadd.f32 %v98, %v600
  %v602 = vpop.f32.mrb[0].mxu0
  %603 = vmatprep.mubr.bf16.mxu0 0
  %604 = vmatmul.mubr.bf16.gmra.mrb[0].mxu0 %v346
  %v605 = vpop.f32.mrb[0].mxu0
  %v606 = vadd.f32 %v98, %v605
  %v607 = vpop.f32.mrb[0].mxu0
  %v608 = vpop.f32.mrb[0].mxu0
  %v609 = vadd.f32 %v98, %v608
  %v610 = vpop.f32.mrb[0].mxu0
  %611 = vmatprep.mubr.bf16.mxu0 0
  %612 = vmatmul.mubr.bf16.gmra.mrb[0].mxu0 %v349
  %v613 = vpop.f32.mrb[0].mxu0
  %v614 = vadd.f32 %v98, %v613
  %v615 = vpop.f32.mrb[0].mxu0
  %v616 = vpop.f32.mrb[0].mxu0
  %v617 = vadd.f32 %v98, %v616
  %v618 = vpop.f32.mrb[0].mxu0
  %619 = vmatprep.mubr.bf16.mxu0 0
  %620 = vmatmul.mubr.bf16.gmra.mrb[0].mxu0 %v352
  %v621 = vpop.f32.mrb[0].mxu0
  %v622 = vadd.f32 %v98, %v621
  %v623 = vpop.f32.mrb[0].mxu0
  %v624 = vpop.f32.mrb[0].mxu0
  %v625 = vadd.f32 %v98, %v624
  %v626 = vpop.f32.mrb[0].mxu0
  %627 = vmatprep.mubr.bf16.mxu0 0
  %628 = vmatmul.mubr.bf16.gmra.mrb[0].mxu0 %v355
  %v629 = vpop.f32.mrb[0].mxu0
  %v630 = vadd.f32 %v98, %v629
  %v631 = vpop.f32.mrb[0].mxu0
  %v632 = vpop.f32.mrb[0].mxu0
  %v633 = vadd.f32 %v98, %v632
  %v634 = vpop.f32.mrb[0].mxu0
  %635 = vmatprep.mubr.bf16.mxu0 0
  %636 = vmatmul.mubr.bf16.gmra.mrb[0].mxu0 %v358
  %v637 = vpop.f32.mrb[0].mxu0
  %v638 = vadd.f32 %v98, %v637
  %v639 = vpop.f32.mrb[0].mxu0
  %v640 = vpop.f32.mrb[0].mxu0
  %v641 = vadd.f32 %v98, %v640
  %v642 = vpop.f32.mrb[0].mxu0
  %643 = vmatprep.mubr.bf16.mxu0 0
  %644 = vmatmul.mubr.bf16.gmra.mrb[0].mxu0 %v361
  %v645 = vpop.f32.mrb[0].mxu0
  %v646 = vadd.f32 %v98, %v645
  %v647 = vpop.f32.mrb[0].mxu0
  %v648 = vpop.f32.mrb[0].mxu0
  %v649 = vadd.f32 %v98, %v648
  %v650 = vpop.f32.mrb[0].mxu0
  %651 = vdwg.mxu0
  %v652 = vmax.f32 %v398, 0.0
  %v653 = vmax.f32 %v401, 0.0
  %v654 = vmax.f32 %v406, 0.0
  %v655 = vmax.f32 %v409, 0.0
  %v656 = vmax.f32 %v414, 0.0
  %v657 = vmax.f32 %v417, 0.0
  %v658 = vmax.f32 %v422, 0.0
  %v659 = vmax.f32 %v425, 0.0
  %v660 = vmax.f32 %v430, 0.0
  %v661 = vmax.f32 %v433, 0.0
  %v662 = vmax.f32 %v438, 0.0
  %v663 = vmax.f32 %v441, 0.0
  %v664 = vmax.f32 %v446, 0.0
  %v665 = vmax.f32 %v449, 0.0
  %v666 = vmax.f32 %v454, 0.0
  %v667 = vmax.f32 %v457, 0.0
  %v668 = vmax.f32 %v462, 0.0
  %v669 = vmax.f32 %v465, 0.0
  %v670 = vmax.f32 %v470, 0.0
  %v671 = vmax.f32 %v473, 0.0
  %v672 = vmax.f32 %v478, 0.0
  %v673 = vmax.f32 %v481, 0.0
  %v674 = vmax.f32 %v486, 0.0
  %v675 = vmax.f32 %v489, 0.0
  %v676 = vmax.f32 %v494, 0.0
  %v677 = vmax.f32 %v497, 0.0
  %v678 = vmax.f32 %v502, 0.0
  %v679 = vmax.f32 %v505, 0.0
  %v680 = vmax.f32 %v510, 0.0
  %v681 = vmax.f32 %v513, 0.0
  %v682 = vmax.f32 %v518, 0.0
  %v683 = vmax.f32 %v521, 0.0
  %v684 = vmax.f32 %v526, 0.0
  %v685 = vmax.f32 %v529, 0.0
  %v686 = vmax.f32 %v534, 0.0
  %v687 = vmax.f32 %v537, 0.0
  %v688 = vmax.f32 %v542, 0.0
  %v689 = vmax.f32 %v545, 0.0
  %v690 = vmax.f32 %v550, 0.0
  %v691 = vmax.f32 %v553, 0.0
  %v692 = vmax.f32 %v558, 0.0
  %v693 = vmax.f32 %v561, 0.0
  %v694 = vmax.f32 %v566, 0.0
  %v695 = vmax.f32 %v569, 0.0
  %v696 = vmax.f32 %v574, 0.0
  %v697 = vmax.f32 %v577, 0.0
  %v698 = vmax.f32 %v582, 0.0
  %v699 = vmax.f32 %v585, 0.0
  %v700 = vmax.f32 %v590, 0.0
  %v701 = vmax.f32 %v593, 0.0
  %v702 = vmax.f32 %v598, 0.0
  %v703 = vmax.f32 %v601, 0.0
  %v704 = vmax.f32 %v606, 0.0
  %v705 = vmax.f32 %v609, 0.0
  %v706 = vmax.f32 %v614, 0.0
  %v707 = vmax.f32 %v617, 0.0
  %v708 = vmax.f32 %v622, 0.0
  %v709 = vmax.f32 %v625, 0.0
  %v710 = vmax.f32 %v630, 0.0
  %v711 = vmax.f32 %v633, 0.0
  %v712 = vmax.f32 %v638, 0.0
  %v713 = vmax.f32 %v641, 0.0
  %v714 = vmax.f32 %v646, 0.0
  %v715 = vmax.f32 %v649, 0.0
  %v716 = vld [vmem:[%s3] sm:$0xff]
  %v717 = vld [vmem:[%s3 + $0x8] sm:$0x1]
  %v718 = vlaneseq
  %v719 = vshrl.u32 %v718, 7
  %v720 = vsub.s32 4, %v719
  %v721 = vrot.slane %v716, %v720
  %v722 = vmul.f32 %v652, %v721
  %v723 = vmul.f32 %v653, %v721
  %v724 = vmul.f32 %v654, %v721
  %v725 = vmul.f32 %v655, %v721
  %v726 = vmul.f32 %v656, %v721
  %v727 = vmul.f32 %v657, %v721
  %v728 = vmul.f32 %v658, %v721
  %v729 = vmul.f32 %v659, %v721
  %v730 = vmul.f32 %v660, %v721
  %v731 = vmul.f32 %v661, %v721
  %v732 = vmul.f32 %v662, %v721
  %v733 = vmul.f32 %v663, %v721
  %v734 = vmul.f32 %v664, %v721
  %v735 = vmul.f32 %v665, %v721
  %v736 = vmul.f32 %v666, %v721
  %v737 = vmul.f32 %v667, %v721
  %v738 = vlaneseq
  %v739 = vshrl.u32 %v738, 7
  %v740 = vsub.s32 7, %v739
  %v741 = vrot.slane %v716, %v740
  %v742 = vmul.f32 %v684, %v741
  %v743 = vmul.f32 %v685, %v741
  %v744 = vmul.f32 %v686, %v741
  %v745 = vmul.f32 %v687, %v741
  %v746 = vmul.f32 %v688, %v741
  %v747 = vmul.f32 %v689, %v741
  %v748 = vmul.f32 %v690, %v741
  %v749 = vmul.f32 %v691, %v741
  %v750 = vmul.f32 %v692, %v741
  %v751 = vmul.f32 %v693, %v741
  %v752 = vmul.f32 %v694, %v741
  %v753 = vmul.f32 %v695, %v741
  %v754 = vmul.f32 %v696, %v741
  %v755 = vmul.f32 %v697, %v741
  %v756 = vmul.f32 %v698, %v741
  %v757 = vmul.f32 %v699, %v741
  %v758 = vadd.f32 %v722, %v742
  %v759 = vadd.f32 %v723, %v743
  %v760 = vadd.f32 %v724, %v744
  %v761 = vadd.f32 %v725, %v745
  %v762 = vadd.f32 %v726, %v746
  %v763 = vadd.f32 %v727, %v747
  %v764 = vadd.f32 %v728, %v748
  %v765 = vadd.f32 %v729, %v749
  %v766 = vadd.f32 %v730, %v750
  %v767 = vadd.f32 %v731, %v751
  %v768 = vadd.f32 %v732, %v752
  %v769 = vadd.f32 %v733, %v753
  %v770 = vadd.f32 %v734, %v754
  %v771 = vadd.f32 %v735, %v755
  %v772 = vadd.f32 %v736, %v756
  %v773 = vadd.f32 %v737, %v757
  %v774 = vlaneseq
  %v775 = vshrl.u32 %v774, 7
  %v776 = vsub.s32 1, %v775
  %v777 = vrot.slane %v716, %v776
  %v778 = vmul.f32 %v777, 0.0
  %v779 = vmul.f32 %v684, %v777
  %v780 = vmul.f32 %v685, %v777
  %v781 = vmul.f32 %v686, %v777
  %v782 = vmul.f32 %v687, %v777
  %v783 = vmul.f32 %v688, %v777
  %v784 = vmul.f32 %v689, %v777
  %v785 = vmul.f32 %v690, %v777
  %v786 = vmul.f32 %v692, %v777
  %v787 = vmul.f32 %v693, %v777
  %v788 = vmul.f32 %v694, %v777
  %v789 = vmul.f32 %v695, %v777
  %v790 = vmul.f32 %v696, %v777
  %v791 = vmul.f32 %v697, %v777
  %v792 = vmul.f32 %v698, %v777
  %v793 = vadd.f32 %v758, %v778
  %v794 = vadd.f32 %v759, %v779
  %v795 = vadd.f32 %v760, %v780
  %v796 = vadd.f32 %v761, %v781
  %v797 = vadd.f32 %v762, %v782
  %v798 = vadd.f32 %v763, %v783
  %v799 = vadd.f32 %v764, %v784
  %v800 = vadd.f32 %v765, %v785
  %v801 = vadd.f32 %v766, %v778
  %v802 = vadd.f32 %v767, %v786
  %v803 = vadd.f32 %v768, %v787
  %v804 = vadd.f32 %v769, %v788
  %v805 = vadd.f32 %v770, %v789
  %v806 = vadd.f32 %v771, %v790
  %v807 = vadd.f32 %v772, %v791
  %v808 = vadd.f32 %v773, %v792
  %v809 = vlaneseq
  %v810 = vshrl.u32 %v809, 7
  %v811 = vsub.s32 5, %v810
  %v812 = vrot.slane %v716, %v811
  %v813 = vmul.f32 %v668, %v812
  %v814 = vmul.f32 %v669, %v812
  %v815 = vmul.f32 %v670, %v812
  %v816 = vmul.f32 %v671, %v812
  %v817 = vmul.f32 %v672, %v812
  %v818 = vmul.f32 %v673, %v812
  %v819 = vmul.f32 %v674, %v812
  %v820 = vmul.f32 %v675, %v812
  %v821 = vmul.f32 %v676, %v812
  %v822 = vmul.f32 %v677, %v812
  %v823 = vmul.f32 %v678, %v812
  %v824 = vmul.f32 %v679, %v812
  %v825 = vmul.f32 %v680, %v812
  %v826 = vmul.f32 %v681, %v812
  %v827 = vmul.f32 %v682, %v812
  %v828 = vmul.f32 %v683, %v812
  %v829 = vadd.f32 %v793, %v813
  %v830 = vadd.f32 %v794, %v814
  %v831 = vadd.f32 %v795, %v815
  %v832 = vadd.f32 %v796, %v816
  %v833 = vadd.f32 %v797, %v817
  %v834 = vadd.f32 %v798, %v818
  %v835 = vadd.f32 %v799, %v819
  %v836 = vadd.f32 %v800, %v820
  %v837 = vadd.f32 %v801, %v821
  %v838 = vadd.f32 %v802, %v822
  %v839 = vadd.f32 %v803, %v823
  %v840 = vadd.f32 %v804, %v824
  %v841 = vadd.f32 %v805, %v825
  %v842 = vadd.f32 %v806, %v826
  %v843 = vadd.f32 %v807, %v827
  %v844 = vadd.f32 %v808, %v828
  %v861 = vrot.slane %v668, 7
  %v862 = vrot.slane %v669, 7
  %v863 = vrot.slane %v670, 7
  %v864 = vrot.slane %v671, 7
  %v865 = vrot.slane %v672, 7
  %v866 = vrot.slane %v673, 7
  %v867 = vrot.slane %v674, 7
  %v868 = vrot.slane %v675, 7
  %v869 = vrot.slane %v676, 7
  %v870 = vrot.slane %v677, 7
  %v871 = vrot.slane %v678, 7
  %v872 = vrot.slane %v679, 7
  %v873 = vrot.slane %v680, 7
  %v874 = vrot.slane %v681, 7
  %v875 = vrot.slane %v682, 7
  %v876 = vrot.slane %v683, 7
  %vm893 = vcmask 1040384
  %v894 = vsel %vm893, 0.0, %v861
  %v895 = vsel %vm893, 0.0, %v862
  %v896 = vsel %vm893, 0.0, %v863
  %v897 = vsel %vm893, 0.0, %v864
  %v898 = vsel %vm893, 0.0, %v865
  %v899 = vsel %vm893, 0.0, %v866
  %v900 = vsel %vm893, 0.0, %v867
  %v901 = vsel %vm893, 0.0, %v868
  %v902 = vsel %vm893, 0.0, %v869
  %v903 = vsel %vm893, 0.0, %v870
  %v904 = vsel %vm893, 0.0, %v871
  %v905 = vsel %vm893, 0.0, %v872
  %v906 = vsel %vm893, 0.0, %v873
  %v907 = vsel %vm893, 0.0, %v874
  %v908 = vsel %vm893, 0.0, %v875
  %v909 = vsel %vm893, 0.0, %v876
  %v910 = vlaneseq
  %v911 = vshrl.u32 %v910, 7
  %v912 = vsub.s32 3, %v911
  %v913 = vrot.slane %v716, %v912
  %v914 = vmul.f32 %v894, %v913
  %v915 = vmul.f32 %v895, %v913
  %v916 = vmul.f32 %v896, %v913
  %v917 = vmul.f32 %v897, %v913
  %v918 = vmul.f32 %v898, %v913
  %v919 = vmul.f32 %v899, %v913
  %v920 = vmul.f32 %v900, %v913
  %v921 = vmul.f32 %v901, %v913
  %v922 = vmul.f32 %v902, %v913
  %v923 = vmul.f32 %v903, %v913
  %v924 = vmul.f32 %v904, %v913
  %v925 = vmul.f32 %v905, %v913
  %v926 = vmul.f32 %v906, %v913
  %v927 = vmul.f32 %v907, %v913
  %v928 = vmul.f32 %v908, %v913
  %v929 = vmul.f32 %v909, %v913
  %v930 = vadd.f32 %v829, %v914
  %v931 = vadd.f32 %v830, %v915
  %v932 = vadd.f32 %v831, %v916
  %v933 = vadd.f32 %v832, %v917
  %v934 = vadd.f32 %v833, %v918
  %v935 = vadd.f32 %v834, %v919
  %v936 = vadd.f32 %v835, %v920
  %v937 = vadd.f32 %v836, %v921
  %v938 = vadd.f32 %v837, %v922
  %v939 = vadd.f32 %v838, %v923
  %v940 = vadd.f32 %v839, %v924
  %v941 = vadd.f32 %v840, %v925
  %v942 = vadd.f32 %v841, %v926
  %v943 = vadd.f32 %v842, %v927
  %v944 = vadd.f32 %v843, %v928
  %v945 = vadd.f32 %v844, %v929
  %v946 = vlaneseq
  %v947 = vshrl.u32 %v946, 7
  %v948 = vsub.s32 0, %v947
  %v949 = vrot.slane %v717, %v948
  %v950 = vmul.f32 %v700, %v949
  %v951 = vmul.f32 %v701, %v949
  %v952 = vmul.f32 %v702, %v949
  %v953 = vmul.f32 %v703, %v949
  %v954 = vmul.f32 %v704, %v949
  %v955 = vmul.f32 %v705, %v949
  %v956 = vmul.f32 %v706, %v949
  %v957 = vmul.f32 %v707, %v949
  %v958 = vmul.f32 %v708, %v949
  %v959 = vmul.f32 %v709, %v949
  %v960 = vmul.f32 %v710, %v949
  %v961 = vmul.f32 %v711, %v949
  %v962 = vmul.f32 %v712, %v949
  %v963 = vmul.f32 %v713, %v949
  %v964 = vmul.f32 %v714, %v949
  %v965 = vmul.f32 %v715, %v949
  %v966 = vadd.f32 %v930, %v950
  %v967 = vadd.f32 %v931, %v951
  %v968 = vadd.f32 %v932, %v952
  %v969 = vadd.f32 %v933, %v953
  %v970 = vadd.f32 %v934, %v954
  %v971 = vadd.f32 %v935, %v955
  %v972 = vadd.f32 %v936, %v956
  %v973 = vadd.f32 %v937, %v957
  %v974 = vadd.f32 %v938, %v958
  %v975 = vadd.f32 %v939, %v959
  %v976 = vadd.f32 %v940, %v960
  %v977 = vadd.f32 %v941, %v961
  %v978 = vadd.f32 %v942, %v962
  %v979 = vadd.f32 %v943, %v963
  %v980 = vadd.f32 %v944, %v964
  %v981 = vadd.f32 %v945, %v965
  %v982 = vlaneseq
  %v983 = vshrl.u32 %v982, 7
  %v984 = vsub.s32 2, %v983
  %v985 = vrot.slane %v716, %v984
  %v986 = vmul.f32 %v985, 0.0
  %v987 = vmul.f32 %v700, %v985
  %v988 = vmul.f32 %v701, %v985
  %v989 = vmul.f32 %v702, %v985
  %v990 = vmul.f32 %v703, %v985
  %v991 = vmul.f32 %v704, %v985
  %v992 = vmul.f32 %v705, %v985
  %v993 = vmul.f32 %v706, %v985
  %v994 = vmul.f32 %v708, %v985
  %v995 = vmul.f32 %v709, %v985
  %v996 = vmul.f32 %v710, %v985
  %v997 = vmul.f32 %v711, %v985
  %v998 = vmul.f32 %v712, %v985
  %v999 = vmul.f32 %v713, %v985
  %v1000 = vmul.f32 %v714, %v985
  %v1001 = vadd.f32 %v966, %v986
  %v1002 = vadd.f32 %v967, %v987
  %v1003 = vadd.f32 %v968, %v988
  %v1004 = vadd.f32 %v969, %v989
  %v1005 = vadd.f32 %v970, %v990
  %v1006 = vadd.f32 %v971, %v991
  %v1007 = vadd.f32 %v972, %v992
  %v1008 = vadd.f32 %v973, %v993
  %v1009 = vadd.f32 %v974, %v986
  %v1010 = vadd.f32 %v975, %v994
  %v1011 = vadd.f32 %v976, %v995
  %v1012 = vadd.f32 %v977, %v996
  %v1013 = vadd.f32 %v978, %v997
  %v1014 = vadd.f32 %v979, %v998
  %v1015 = vadd.f32 %v980, %v999
  %v1016 = vadd.f32 %v981, %v1000
  %v1033 = vrot.slane %v700, 7
  %v1034 = vrot.slane %v701, 7
  %v1035 = vrot.slane %v702, 7
  %v1036 = vrot.slane %v703, 7
  %v1037 = vrot.slane %v704, 7
  %v1038 = vrot.slane %v705, 7
  %v1039 = vrot.slane %v706, 7
  %v1040 = vrot.slane %v707, 7
  %v1041 = vrot.slane %v708, 7
  %v1042 = vrot.slane %v709, 7
  %v1043 = vrot.slane %v710, 7
  %v1044 = vrot.slane %v711, 7
  %v1045 = vrot.slane %v712, 7
  %v1046 = vrot.slane %v713, 7
  %v1047 = vrot.slane %v714, 7
  %v1048 = vrot.slane %v715, 7
  %v1065 = vsel %vm893, 0.0, %v1033
  %v1066 = vsel %vm893, 0.0, %v1034
  %v1067 = vsel %vm893, 0.0, %v1035
  %v1068 = vsel %vm893, 0.0, %v1036
  %v1069 = vsel %vm893, 0.0, %v1037
  %v1070 = vsel %vm893, 0.0, %v1038
  %v1071 = vsel %vm893, 0.0, %v1039
  %v1072 = vsel %vm893, 0.0, %v1040
  %v1073 = vsel %vm893, 0.0, %v1041
  %v1074 = vsel %vm893, 0.0, %v1042
  %v1075 = vsel %vm893, 0.0, %v1043
  %v1076 = vsel %vm893, 0.0, %v1044
  %v1077 = vsel %vm893, 0.0, %v1045
  %v1078 = vsel %vm893, 0.0, %v1046
  %v1079 = vsel %vm893, 0.0, %v1047
  %v1080 = vsel %vm893, 0.0, %v1048
  %v1081 = vlaneseq
  %v1082 = vshrl.u32 %v1081, 7
  %v1083 = vsub.s32 6, %v1082
  %v1084 = vrot.slane %v716, %v1083
  %v1085 = vmul.f32 %v1065, %v1084
  %v1086 = vmul.f32 %v1066, %v1084
  %v1087 = vmul.f32 %v1067, %v1084
  %v1088 = vmul.f32 %v1068, %v1084
  %v1089 = vmul.f32 %v1069, %v1084
  %v1090 = vmul.f32 %v1070, %v1084
  %v1091 = vmul.f32 %v1071, %v1084
  %v1092 = vmul.f32 %v1072, %v1084
  %v1093 = vmul.f32 %v1073, %v1084
  %v1094 = vmul.f32 %v1074, %v1084
  %v1095 = vmul.f32 %v1075, %v1084
  %v1096 = vmul.f32 %v1076, %v1084
  %v1097 = vmul.f32 %v1077, %v1084
  %v1098 = vmul.f32 %v1078, %v1084
  %v1099 = vmul.f32 %v1079, %v1084
  %v1100 = vmul.f32 %v1080, %v1084
  %v1101 = vadd.f32 %v1001, %v1085
  %v1102 = vadd.f32 %v1002, %v1086
  %v1103 = vadd.f32 %v1003, %v1087
  %v1104 = vadd.f32 %v1004, %v1088
  %v1105 = vadd.f32 %v1005, %v1089
  %v1106 = vadd.f32 %v1006, %v1090
  %v1107 = vadd.f32 %v1007, %v1091
  %v1108 = vadd.f32 %v1008, %v1092
  %v1109 = vadd.f32 %v1009, %v1093
  %v1110 = vadd.f32 %v1010, %v1094
  %v1111 = vadd.f32 %v1011, %v1095
  %v1112 = vadd.f32 %v1012, %v1096
  %v1113 = vadd.f32 %v1013, %v1097
  %v1114 = vadd.f32 %v1014, %v1098
  %v1115 = vadd.f32 %v1015, %v1099
  %v1116 = vadd.f32 %v1016, %v1100
  %v1117 = vlaneseq
  %v1118 = vshrl.u32 %v1117, 7
  %v1119 = vsub.s32 0, %v1118
  %v1120 = vrot.slane %v716, %v1119
  %v1121 = vmul.f32 %v1120, 0.0
  %v1122 = vmul.f32 %v1065, %v1120
  %v1123 = vmul.f32 %v1066, %v1120
  %v1124 = vmul.f32 %v1067, %v1120
  %v1125 = vmul.f32 %v1068, %v1120
  %v1126 = vmul.f32 %v1069, %v1120
  %v1127 = vmul.f32 %v1070, %v1120
  %v1128 = vmul.f32 %v1071, %v1120
  %v1129 = vmul.f32 %v1073, %v1120
  %v1130 = vmul.f32 %v1074, %v1120
  %v1131 = vmul.f32 %v1075, %v1120
  %v1132 = vmul.f32 %v1076, %v1120
  %v1133 = vmul.f32 %v1077, %v1120
  %v1134 = vmul.f32 %v1078, %v1120
  %v1135 = vmul.f32 %v1079, %v1120
  %v1136 = vadd.f32 %v1101, %v1121
  %v1137 = vadd.f32 %v1102, %v1122
  %v1138 = vadd.f32 %v1103, %v1123
  %v1139 = vadd.f32 %v1104, %v1124
  %v1140 = vadd.f32 %v1105, %v1125
  %v1141 = vadd.f32 %v1106, %v1126
  %v1142 = vadd.f32 %v1107, %v1127
  %v1143 = vadd.f32 %v1108, %v1128
  %v1144 = vadd.f32 %v1109, %v1121
  %v1145 = vadd.f32 %v1110, %v1129
  %v1146 = vadd.f32 %v1111, %v1130
  %v1147 = vadd.f32 %v1112, %v1131
  %v1148 = vadd.f32 %v1113, %v1132
  %v1149 = vadd.f32 %v1114, %v1133
  %v1150 = vadd.f32 %v1115, %v1134
  %v1151 = vadd.f32 %v1116, %v1135
  %v1152 = vld [vmem:[%s4] sm:$0x1]
  %v1154 = vlaneseq
  %v1155 = vshrl.u32 %v1154, 7
  %v1156 = vsub.s32 0, %v1155
  %v1157 = vrot.slane %v1152, %v1156
  %v1159 = vadd.f32 %v1136, %v1157
  %v1160 = vadd.f32 %v1137, %v1157
  %v1161 = vadd.f32 %v1138, %v1157
  %v1162 = vadd.f32 %v1139, %v1157
  %v1163 = vadd.f32 %v1140, %v1157
  %v1164 = vadd.f32 %v1141, %v1157
  %v1165 = vadd.f32 %v1142, %v1157
  %v1166 = vadd.f32 %v1143, %v1157
  %v1167 = vadd.f32 %v1144, %v1157
  %v1168 = vadd.f32 %v1145, %v1157
  %v1169 = vadd.f32 %v1146, %v1157
  %v1170 = vadd.f32 %v1147, %v1157
  %v1171 = vadd.f32 %v1148, %v1157
  %v1172 = vadd.f32 %v1149, %v1157
  %v1173 = vadd.f32 %v1150, %v1157
  %v1174 = vadd.f32 %v1151, %v1157
  %v1175 = vmax.f32 %v1159, 0.0
  %v1176 = vmax.f32 %v1160, 0.0
  %v1177 = vmax.f32 %v1161, 0.0
  %v1178 = vmax.f32 %v1162, 0.0
  %v1179 = vmax.f32 %v1163, 0.0
  %v1180 = vmax.f32 %v1164, 0.0
  %v1181 = vmax.f32 %v1165, 0.0
  %v1182 = vmax.f32 %v1166, 0.0
  %v1183 = vmax.f32 %v1167, 0.0
  %v1184 = vmax.f32 %v1168, 0.0
  %v1185 = vmax.f32 %v1169, 0.0
  %v1186 = vmax.f32 %v1170, 0.0
  %v1187 = vmax.f32 %v1171, 0.0
  %v1188 = vmax.f32 %v1172, 0.0
  %v1189 = vmax.f32 %v1173, 0.0
  %v1190 = vmax.f32 %v1174, 0.0
  %v1191 = vpack.c.bf16 %v1176, %v1175
  %v1192 = vpack.c.bf16 %v1178, %v1177
  %v1193 = vpack.c.bf16 %v1180, %v1179
  %v1194 = vpack.c.bf16 %v1182, %v1181
  %v1195 = vpack.c.bf16 %v1184, %v1183
  %v1196 = vpack.c.bf16 %v1186, %v1185
  %v1197 = vpack.c.bf16 %v1188, %v1187
  %v1198 = vpack.c.bf16 %v1190, %v1189
  %v1199 = vld [vmem:[%s5] sm:$0xf]
  %v1200 = vld [vmem:[%s5 + $0x4] sm:$0xf]
  %v1201 = vld [vmem:[%s5 + $0x8] sm:$0xf]
  %v1202 = vld [vmem:[%s5 + $0xc] sm:$0xf]
  %v1203 = vld [vmem:[%s5 + $0x10] sm:$0xf]
  %v1204 = vld [vmem:[%s5 + $0x14] sm:$0xf]
  %v1205 = vld [vmem:[%s5 + $0x18] sm:$0xf]
  %v1206 = vld [vmem:[%s5 + $0x1c] sm:$0xf]
  %v1207 = vld [vmem:[%s5 + $0x20] sm:$0xf]
  %v1208 = vld [vmem:[%s5 + $0x24] sm:$0xf]
  %v1209 = vld [vmem:[%s5 + $0x28] sm:$0xf]
  %v1210 = vld [vmem:[%s5 + $0x2c] sm:$0xf]
  %v1211 = vld [vmem:[%s5 + $0x30] sm:$0xf]
  %v1212 = vld [vmem:[%s5 + $0x34] sm:$0xf]
  %v1213 = vld [vmem:[%s5 + $0x38] sm:$0xf]
  %v1214 = vld [vmem:[%s5 + $0x3c] sm:$0xf]
  %v1215 = vld [vmem:[%s6] sm:$0x1]
  %v1217 = vlaneseq
  %v1218 = vshrl.u32 %v1217, 7
  %v1219 = vsub.s32 0, %v1218
  %v1220 = vrot.slane %v1215, %v1219
  %v1238 = vunpack.c.l.b16 %v1199
  %v1239 = vunpack.c.l.b16 %v1200
  %v1240 = vunpack.c.l.b16 %v1201
  %v1241 = vunpack.c.l.b16 %v1202
  %v1242 = vunpack.c.l.b16 %v1203
  %v1243 = vunpack.c.l.b16 %v1204
  %v1244 = vunpack.c.l.b16 %v1205
  %v1245 = vunpack.c.l.b16 %v1206
  %v1246 = vunpack.c.l.b16 %v1207
  %v1247 = vunpack.c.l.b16 %v1208
  %v1248 = vunpack.c.l.b16 %v1209
  %v1249 = vunpack.c.l.b16 %v1210
  %v1250 = vunpack.c.l.b16 %v1211
  %v1251 = vunpack.c.l.b16 %v1212
  %v1252 = vunpack.c.l.b16 %v1213
  %v1253 = vunpack.c.l.b16 %v1214
  %v1254 = vpack.c.b16 %v1239, %v1238
  %v1255 = vpack.c.b16 %v1241, %v1240
  %v1256 = vpack.c.b16 %v1243, %v1242
  %v1257 = vpack.c.b16 %v1245, %v1244
  %v1258 = vpack.c.b16 %v1247, %v1246
  %v1259 = vpack.c.b16 %v1249, %v1248
  %v1260 = vpack.c.b16 %v1251, %v1250
  %v1261 = vpack.c.b16 %v1253, %v1252
  %1270 = vmatprep.subr.bf16.mxu0 0
  %1271 = vmatpush1.bf16.msra.mxu0 %v1254
  %1272 = vmatprep.subr.bf16.mxu0 0
  %1273 = vmatpush1.bf16.msra.mxu0 %v1255
  %1274 = vmatprep.subr.bf16.mxu0 0
  %1275 = vmatpush1.bf16.msra.mxu0 %v1256
  %1276 = vmatprep.subr.bf16.mxu0 0
  %1277 = vmatpush1.bf16.msra.mxu0 %v1257
  %1278 = vmatprep.subr.bf16.mxu0 0
  %1279 = vmatpush1.bf16.msra.mxu0 %v1258
  %1280 = vmatprep.subr.bf16.mxu0 0
  %1281 = vmatpush1.bf16.msra.mxu0 %v1259
  %1282 = vmatprep.subr.bf16.mxu0 0
  %1283 = vmatpush1.bf16.msra.mxu0 %v1260
  %1284 = vmatprep.subr.bf16.mxu0 0
  %1285 = vmatpush1.bf16.msra.mxu0 %v1261
  %1286 = vmatprep.subr.bf16.mxu0 0
  %1287 = vmatpush1.bf16.msra.mxu0 0
  %1288 = vmatprep.subr.bf16.mxu0 0
  %1289 = vmatpush1.bf16.msra.mxu0 0
  %1290 = vmatprep.subr.bf16.mxu0 0
  %1291 = vmatpush1.bf16.msra.mxu0 0
  %1292 = vmatprep.subr.bf16.mxu0 0
  %1293 = vmatpush1.bf16.msra.mxu0 0
  %1294 = vmatprep.subr.bf16.mxu0 0
  %1295 = vmatpush1.bf16.msra.mxu0 0
  %1296 = vmatprep.subr.bf16.mxu0 0
  %1297 = vmatpush1.bf16.msra.mxu0 0
  %1298 = vmatprep.subr.bf16.mxu0 0
  %1299 = vmatpush1.bf16.msra.mxu0 0
  %1300 = vmatprep.subr.bf16.mxu0 0
  %1301 = vmatpush1.bf16.msra.mxu0 0
  %1302 = vmatprep.mubr.bf16.mxu0 0
  %1303 = vmatmul.mubr.bf16.gmra.mrb[0].mxu0 %v1191
  %v1304 = vpop.f32.mrb[0].mxu0
  %v1305 = vadd.f32 %v1220, %v1304
  %v1306 = vpop.f32.mrb[0].mxu0
  %v1307 = vpop.f32.mrb[0].mxu0
  %v1308 = vadd.f32 %v1220, %v1307
  %v1309 = vpop.f32.mrb[0].mxu0
  %1310 = vmatprep.mubr.bf16.mxu0 0
  %1311 = vmatmul.mubr.bf16.gmra.mrb[0].mxu0 %v1192
  %v1312 = vpop.f32.mrb[0].mxu0
  %v1313 = vadd.f32 %v1220, %v1312
  %v1314 = vpop.f32.mrb[0].mxu0
  %v1315 = vpop.f32.mrb[0].mxu0
  %v1316 = vadd.f32 %v1220, %v1315
  %v1317 = vpop.f32.mrb[0].mxu0
  %1318 = vmatprep.mubr.bf16.mxu0 0
  %1319 = vmatmul.mubr.bf16.gmra.mrb[0].mxu0 %v1193
  %v1320 = vpop.f32.mrb[0].mxu0
  %v1321 = vadd.f32 %v1220, %v1320
  %v1322 = vpop.f32.mrb[0].mxu0
  %v1323 = vpop.f32.mrb[0].mxu0
  %v1324 = vadd.f32 %v1220, %v1323
  %v1325 = vpop.f32.mrb[0].mxu0
  %1326 = vmatprep.mubr.bf16.mxu0 0
  %1327 = vmatmul.mubr.bf16.gmra.mrb[0].mxu0 %v1194
  %v1328 = vpop.f32.mrb[0].mxu0
  %v1329 = vadd.f32 %v1220, %v1328
  %v1330 = vpop.f32.mrb[0].mxu0
  %v1331 = vpop.f32.mrb[0].mxu0
  %v1332 = vadd.f32 %v1220, %v1331
  %v1333 = vpop.f32.mrb[0].mxu0
  %1334 = vmatprep.mubr.bf16.mxu0 0
  %1335 = vmatmul.mubr.bf16.gmra.mrb[0].mxu0 %v1195
  %v1336 = vpop.f32.mrb[0].mxu0
  %v1337 = vadd.f32 %v1220, %v1336
  %v1338 = vpop.f32.mrb[0].mxu0
  %v1339 = vpop.f32.mrb[0].mxu0
  %v1340 = vadd.f32 %v1220, %v1339
  %v1341 = vpop.f32.mrb[0].mxu0
  %1342 = vmatprep.mubr.bf16.mxu0 0
  %1343 = vmatmul.mubr.bf16.gmra.mrb[0].mxu0 %v1196
  %v1344 = vpop.f32.mrb[0].mxu0
  %v1345 = vadd.f32 %v1220, %v1344
  %v1346 = vpop.f32.mrb[0].mxu0
  %v1347 = vpop.f32.mrb[0].mxu0
  %v1348 = vadd.f32 %v1220, %v1347
  %v1349 = vpop.f32.mrb[0].mxu0
  %1350 = vmatprep.mubr.bf16.mxu0 0
  %1351 = vmatmul.mubr.bf16.gmra.mrb[0].mxu0 %v1197
  %v1352 = vpop.f32.mrb[0].mxu0
  %v1353 = vadd.f32 %v1220, %v1352
  %v1354 = vpop.f32.mrb[0].mxu0
  %v1355 = vpop.f32.mrb[0].mxu0
  %v1356 = vadd.f32 %v1220, %v1355
  %v1357 = vpop.f32.mrb[0].mxu0
  %1358 = vmatprep.mubr.bf16.mxu0 0
  %1359 = vmatmul.mubr.bf16.gmra.mrb[0].mxu0 %v1198
  %v1360 = vpop.f32.mrb[0].mxu0
  %v1361 = vadd.f32 %v1220, %v1360
  %v1362 = vpop.f32.mrb[0].mxu0
  %v1363 = vpop.f32.mrb[0].mxu0
  %v1364 = vadd.f32 %v1220, %v1363
  %v1365 = vpop.f32.mrb[0].mxu0
  %1366 = vdwg.mxu0
  %vm1367 = vcmask 261120
  %1368 = vst.msk [vmem:[%s7] sm:$0xff] %vm1367, %v1305
  %1369 = vst.msk [vmem:[%s7 + $0x8] sm:$0xff] %vm1367, %v1308
  %1370 = vst.msk [vmem:[%s7 + $0x10] sm:$0xff] %vm1367, %v1313
  %1371 = vst.msk [vmem:[%s7 + $0x18] sm:$0xff] %vm1367, %v1316
  %1372 = vst.msk [vmem:[%s7 + $0x20] sm:$0xff] %vm1367, %v1321
  %1373 = vst.msk [vmem:[%s7 + $0x28] sm:$0xff] %vm1367, %v1324
  %1374 = vst.msk [vmem:[%s7 + $0x30] sm:$0xff] %vm1367, %v1329
  %1375 = vst.msk [vmem:[%s7 + $0x38] sm:$0xff] %vm1367, %v1332
  %1376 = vst.msk [vmem:[%s7 + $0x40] sm:$0xff] %vm1367, %v1337
  %1377 = vst.msk [vmem:[%s7 + $0x48] sm:$0xff] %vm1367, %v1340
  %1378 = vst.msk [vmem:[%s7 + $0x50] sm:$0xff] %vm1367, %v1345
  %1379 = vst.msk [vmem:[%s7 + $0x58] sm:$0xff] %vm1367, %v1348
  %1380 = vst.msk [vmem:[%s7 + $0x60] sm:$0xff] %vm1367, %v1353
  %1381 = vst.msk [vmem:[%s7 + $0x68] sm:$0xff] %vm1367, %v1356
  %1382 = vst.msk [vmem:[%s7 + $0x70] sm:$0xff] %vm1367, %v1361
  %1383 = vst.msk [vmem:[%s7 + $0x78] sm:$0xff] %vm1367, %v1364
  // Predicated region
  $region30: #{tpu_custom_call.1} parent=0 // pred_check
    _
  $region31: #{tpu_custom_call.1} parent=0 // pred_check_branch
    %1385 = sbr.rel (0) target = $region33
  $region32: #{tpu_custom_call.1} parent=0 // pred_region
    _
  $region33: #{tpu_custom_call.1} parent=0 // pred_fallthru
    _
  // Predicated region
  $region34: #{tpu_custom_call.1} parent=0 // pred_check
    _
  $region35: #{tpu_custom_call.1} parent=0 // pred_check_branch
    %1387 = sbr.rel (0) target = $region37
  $region36: #{tpu_custom_call.1} parent=0 // pred_region
    _
  $region37: #{tpu_custom_call.1} parent=0 // pred_fallthru
    _

</llo_original>
